<compile_context>
chip_gen: v7x
topology: tpu7x:2x2x1
jax: 0.10.0
libtpu: 0.0.40
codegen_flags: <defaults>
</compile_context>

<pallas_src>
import jax
import jax.numpy as jnp
from jax.experimental import pallas as pl
from jax.experimental.pallas import tpu as pltpu

NEG_SLOPE = 0.01   # F.leaky_relu default negative_slope
TB_MAX = 2048      # batch tile cap (fits scoped VMEM on all of v5e/v6e/v7x)


def _round_up(n, m):
    return (n + m - 1) // m * m


def _leaky_relu(x):
    return jnp.where(x > 0, x, NEG_SLOPE * x)


def mlp_kernel(x_ref, w1_ref, b1_ref, w2_ref, b2_ref, w3t_ref, b3_ref, o_ref):
    x = x_ref[...]

    h1 = jnp.dot(x, w1_ref[...], preferred_element_type=jnp.float32) + b1_ref[...]
    h1 = _leaky_relu(h1)

    h2 = jnp.dot(h1, w2_ref[...], preferred_element_type=jnp.float32) + b2_ref[...]
    h2 = _leaky_relu(h2)

    # fc3 (10 -> 1): VPU multiply + lane reduction; avoids a nearly-empty MXU
    # matmul.  w3t_ref is (1, 10), broadcast against h2 (TB, 10).
    h3 = jnp.sum(h2 * w3t_ref[...], axis=-1, keepdims=True) + b3_ref[...]

    o_ref[...] = h3.astype(o_ref.dtype)


def net_forward(x, params):
    """x: (B, 18) float32 -> (B, 1) float32, matching Net.forward."""
    w1, b1, w2, b2, w3, b3 = params
    B, F_in = x.shape
    F_out = w3.shape[1]

    # Batch tiling: pick the largest tile (<= TB_MAX) and zero-pad the batch
    # so the grid divides evenly.  Padding rows are sliced off afterwards.
    TB = min(TB_MAX, _round_up(B, 8))
    B_pad = _round_up(B, TB)
    if B_pad != B:
        x = jnp.pad(x, ((0, B_pad - B), (0, 0)))
    grid = (B_pad // TB,)

    w3t = w3.T  # (1, 10) row for the VPU epilogue

    def resident(arr):
        # Small weight/bias operands: single full block with a constant index
        # map -> stays VMEM-resident across all grid steps.
        nd = arr.ndim
        return pl.BlockSpec(arr.shape, lambda i, _nd=nd: (0,) * _nd)

    weight_bytes = sum(int(a.size) * a.dtype.itemsize
                       for a in (w1, b1, w2, b2, w3t, b3))
    cost = pl.CostEstimate(
        flops=2 * B_pad * (18 * 20 + 20 * 10 + 10 * 1),
        transcendentals=0,
        bytes_accessed=B_pad * (F_in + F_out) * 4 + weight_bytes,
    )

    out = pl.pallas_call(
        mlp_kernel,
        out_shape=jax.ShapeDtypeStruct((B_pad, F_out), jnp.float32),
        grid=grid,
        in_specs=[
            pl.BlockSpec((TB, F_in), lambda i: (i, 0)),   # streamed x tiles
            resident(w1),
            resident(b1),
            resident(w2),
            resident(b2),
            resident(w3t),
            resident(b3),
        ],
        out_specs=pl.BlockSpec((TB, F_out), lambda i: (i, 0)),
        compiler_params=pltpu.CompilerParams(
            dimension_semantics=("parallel",),
        ),
        cost_estimate=cost,
    )(x, w1, b1, w2, b2, w3t, b3)

    return out[:B]


def init_params(key):
    """Deterministic init mimicking nn.Linear's U(-1/sqrt(fan_in), 1/sqrt(fan_in)).

    Weights stored as (in_features, out_features); biases as (1, out)."""
    dims = [(18, 20), (20, 10), (10, 1)]
    params = []
    for (fan_in, fan_out) in dims:
        key, kw, kb = jax.random.split(key, 3)
        bound = 1.0 / jnp.sqrt(float(fan_in))
        w = jax.random.uniform(kw, (fan_in, fan_out), jnp.float32, -bound, bound)
        b = jax.random.uniform(kb, (1, fan_out), jnp.float32, -bound, bound)
        params.extend([w, b])
    return tuple(params)


def _reference(x, params):
    w1, b1, w2, b2, w3, b3 = params
    h = x @ w1 + b1
    h = jnp.where(h > 0, h, NEG_SLOPE * h)
    h = h @ w2 + b2
    h = jnp.where(h > 0, h, NEG_SLOPE * h)
    return h @ w3 + b3


if __name__ == "__main__":
    key = jax.random.PRNGKey(0)
    key, kx1, kx2 = jax.random.split(key, 3)
    params = init_params(key)

    # Small aligned batch.
    B1 = 8
    x1 = jax.random.normal(kx1, (B1, 18), dtype=jnp.float32)
    out1 = jax.block_until_ready(net_forward(x1, params))
    ref1 = _reference(x1, params)
    assert out1.shape == (B1, 1)
    assert jnp.allclose(out1, ref1, atol=1e-5, rtol=1e-5)

    # Batch that exercises the pad-and-slice tail path (B % 8 != 0).
    B2 = 37
    x2 = jax.random.normal(kx2, (B2, 18), dtype=jnp.float32)
    out2 = jax.block_until_ready(net_forward(x2, params))
    ref2 = _reference(x2, params)
    assert out2.shape == (B2, 1)
    assert jnp.allclose(out2, ref2, atol=1e-5, rtol=1e-5)

    print("KERNEL_OK")
</pallas_src>

<mosaic_0001>
module attributes {stable_mosaic.version = 11 : i64} {
  func.func @mlp_kernel(%arg0: i32, %arg1: memref<8x18xf32, #tpu.memory_space<vmem>>, %arg2: memref<18x20xf32, #tpu.memory_space<vmem>>, %arg3: memref<1x20xf32, #tpu.memory_space<vmem>>, %arg4: memref<20x10xf32, #tpu.memory_space<vmem>>, %arg5: memref<1x10xf32, #tpu.memory_space<vmem>>, %arg6: memref<1x10xf32, #tpu.memory_space<vmem>>, %arg7: memref<1x1xf32, #tpu.memory_space<vmem>>, %arg8: memref<8x1xf32, #tpu.memory_space<vmem>>) attributes {dimension_semantics = [#tpu.dimension_semantics<parallel>], iteration_bounds = array<i64: 1>, scalar_prefetch = 0 : i64, scratch_operands = 0 : i64, tpu.core_type = #tpu.core_type<tc>, window_params = [{transform_indices = @transform_0, window_bounds = array<i64: 8, 18>}, {pipeline_mode = #tpu.pipeline_mode<synchronous>, transform_indices = @transform_1, window_bounds = array<i64: 18, 20>}, {pipeline_mode = #tpu.pipeline_mode<synchronous>, transform_indices = @transform_2, window_bounds = array<i64: 1, 20>}, {pipeline_mode = #tpu.pipeline_mode<synchronous>, transform_indices = @transform_3, window_bounds = array<i64: 20, 10>}, {pipeline_mode = #tpu.pipeline_mode<synchronous>, transform_indices = @transform_4, window_bounds = array<i64: 1, 10>}, {pipeline_mode = #tpu.pipeline_mode<synchronous>, transform_indices = @transform_5, window_bounds = array<i64: 1, 10>}, {pipeline_mode = #tpu.pipeline_mode<synchronous>, transform_indices = @transform_6, window_bounds = array<i64: 1, 1>}, {transform_indices = @transform_7, window_bounds = array<i64: 8, 1>}]} {
    %c0 = arith.constant 0 : index
    %c0_0 = arith.constant 0 : index
    %0 = vector.load %arg1[%c0, %c0_0] : memref<8x18xf32, #tpu.memory_space<vmem>>, vector<8x18xf32>
    %c0_1 = arith.constant 0 : index
    %c0_2 = arith.constant 0 : index
    %1 = vector.load %arg2[%c0_1, %c0_2] : memref<18x20xf32, #tpu.memory_space<vmem>>, vector<18x20xf32>
    %cst = arith.constant dense<0.000000e+00> : vector<8x20xf32>
    %2 = tpu.matmul %0, %1, %cst {dimension_numbers = #tpu.dot_dimension_numbers<[1], [0], [0], [1], [0, 0, 1, 1], [], []>} : vector<8x18xf32>, vector<18x20xf32>, vector<8x20xf32> -> vector<8x20xf32>
    %c0_3 = arith.constant 0 : index
    %c0_4 = arith.constant 0 : index
    %3 = vector.load %arg3[%c0_3, %c0_4] : memref<1x20xf32, #tpu.memory_space<vmem>>, vector<1x20xf32>
    %4 = vector.broadcast %3 : vector<1x20xf32> to vector<8x20xf32>
    %5 = arith.addf %2, %4 : vector<8x20xf32>
    %cst_5 = arith.constant 0.000000e+00 : f32
    %6 = vector.broadcast %cst_5 : f32 to vector<8x20xf32>
    %7 = arith.cmpf ogt, %5, %6 : vector<8x20xf32>
    %cst_6 = arith.constant 0.00999999977 : f32
    %8 = vector.broadcast %cst_6 : f32 to vector<8x20xf32>
    %9 = arith.mulf %8, %5 : vector<8x20xf32>
    %10 = arith.select %7, %5, %9 : vector<8x20xi1>, vector<8x20xf32>
    %c0_7 = arith.constant 0 : index
    %c0_8 = arith.constant 0 : index
    %11 = vector.load %arg4[%c0_7, %c0_8] : memref<20x10xf32, #tpu.memory_space<vmem>>, vector<20x10xf32>
    %cst_9 = arith.constant dense<0.000000e+00> : vector<8x10xf32>
    %12 = tpu.matmul %10, %11, %cst_9 {dimension_numbers = #tpu.dot_dimension_numbers<[1], [0], [0], [1], [0, 0, 1, 1], [], []>} : vector<8x20xf32>, vector<20x10xf32>, vector<8x10xf32> -> vector<8x10xf32>
    %c0_10 = arith.constant 0 : index
    %c0_11 = arith.constant 0 : index
    %13 = vector.load %arg5[%c0_10, %c0_11] : memref<1x10xf32, #tpu.memory_space<vmem>>, vector<1x10xf32>
    %14 = vector.broadcast %13 : vector<1x10xf32> to vector<8x10xf32>
    %15 = arith.addf %12, %14 : vector<8x10xf32>
    %cst_12 = arith.constant 0.000000e+00 : f32
    %16 = vector.broadcast %cst_12 : f32 to vector<8x10xf32>
    %17 = arith.cmpf ogt, %15, %16 : vector<8x10xf32>
    %cst_13 = arith.constant 0.00999999977 : f32
    %18 = vector.broadcast %cst_13 : f32 to vector<8x10xf32>
    %19 = arith.mulf %18, %15 : vector<8x10xf32>
    %20 = arith.select %17, %15, %19 : vector<8x10xi1>, vector<8x10xf32>
    %c0_14 = arith.constant 0 : index
    %c0_15 = arith.constant 0 : index
    %21 = vector.load %arg6[%c0_14, %c0_15] : memref<1x10xf32, #tpu.memory_space<vmem>>, vector<1x10xf32>
    %22 = vector.broadcast %21 : vector<1x10xf32> to vector<8x10xf32>
    %23 = arith.mulf %20, %22 : vector<8x10xf32>
    %cst_16 = arith.constant dense<0.000000e+00> : vector<8xf32>
    %24 = vector.multi_reduction <add>, %23, %cst_16 [1] : vector<8x10xf32> to vector<8xf32>
    %25 = vector.shape_cast %24 : vector<8xf32> to vector<8x1xf32>
    %c0_17 = arith.constant 0 : index
    %c0_18 = arith.constant 0 : index
    %26 = vector.load %arg7[%c0_17, %c0_18] : memref<1x1xf32, #tpu.memory_space<vmem>>, vector<1x1xf32>
    %27 = vector.broadcast %26 : vector<1x1xf32> to vector<8x1xf32>
    %28 = arith.addf %25, %27 : vector<8x1xf32>
    %c0_19 = arith.constant 0 : index
    %c0_20 = arith.constant 0 : index
    %29 = vector.load %arg8[%c0_19, %c0_20] : memref<8x1xf32, #tpu.memory_space<vmem>>, vector<8x1xf32>
    tpu.vector_store %arg8[%c0_19, %c0_20], %28 {strides = array<i32>} : memref<8x1xf32, #tpu.memory_space<vmem>>, vector<8x1xf32>,
    return
  }
  func.func @transform_0(%arg0: i32) -> (i32, i32) {
    %c0_i32 = arith.constant 0 : i32
    %c0_i32_0 = arith.constant 0 : i32
    return %arg0, %c0_i32 : i32, i32
  }
  func.func @transform_1(%arg0: i32) -> (i32, i32) {
    %c0_i32 = arith.constant 0 : i32
    %c0_i32_0 = arith.constant 0 : i32
    %c0_i32_1 = arith.constant 0 : i32
    return %c0_i32, %c0_i32_0 : i32, i32
  }
  func.func @transform_2(%arg0: i32) -> (i32, i32) {
    %c0_i32 = arith.constant 0 : i32
    %c0_i32_0 = arith.constant 0 : i32
    %c0_i32_1 = arith.constant 0 : i32
    return %c0_i32, %c0_i32_0 : i32, i32
  }
  func.func @transform_3(%arg0: i32) -> (i32, i32) {
    %c0_i32 = arith.constant 0 : i32
    %c0_i32_0 = arith.constant 0 : i32
    %c0_i32_1 = arith.constant 0 : i32
    return %c0_i32, %c0_i32_0 : i32, i32
  }
  func.func @transform_4(%arg0: i32) -> (i32, i32) {
    %c0_i32 = arith.constant 0 : i32
    %c0_i32_0 = arith.constant 0 : i32
    %c0_i32_1 = arith.constant 0 : i32
    return %c0_i32, %c0_i32_0 : i32, i32
  }
  func.func @transform_5(%arg0: i32) -> (i32, i32) {
    %c0_i32 = arith.constant 0 : i32
    %c0_i32_0 = arith.constant 0 : i32
    %c0_i32_1 = arith.constant 0 : i32
    return %c0_i32, %c0_i32_0 : i32, i32
  }
  func.func @transform_6(%arg0: i32) -> (i32, i32) {
    %c0_i32 = arith.constant 0 : i32
    %c0_i32_0 = arith.constant 0 : i32
    %c0_i32_1 = arith.constant 0 : i32
    return %c0_i32, %c0_i32_0 : i32, i32
  }
  func.func @transform_7(%arg0: i32) -> (i32, i32) {
    %c0_i32 = arith.constant 0 : i32
    %c0_i32_0 = arith.constant 0 : i32
    return %arg0, %c0_i32 : i32, i32
  }
}

</mosaic_0001>

<llo_original>
// kernel: tpu_custom_call.1
$region0: #{tpu_custom_call.1}
  #allocation0 [shape = 'u32[]', space=smem, size = 0x4, offset = 0x4, fixed_abs, tag = 'smem constant byte address 0x4 - core index']
  #allocation1 [shape = 'u32[144,128]{1,0:T(1,128)}', space=vmem, size = 0x12000, scoped, tag = 'internal scratch']
  #allocation2 [shape = 'f32[1,1]{1,0:T(1,128)S(1)}', space=vmem, size = 0x200, scoped, tag = 'scoped memory for tpu_custom_call.1']
  %s0 = inlined_call_operand.vmem [shape: f32[8,18], index: 0, kind: input, shape index: {}]
  %s1 = inlined_call_operand.vmem [shape: f32[18,20], index: 1, kind: input, shape index: {}]
  %s2 = inlined_call_operand.vmem [shape: f32[1,20], index: 2, kind: input, shape index: {}]
  %s3 = inlined_call_operand.vmem [shape: f32[20,10], index: 3, kind: input, shape index: {}]
  %s4 = inlined_call_operand.vmem [shape: f32[1,10], index: 4, kind: input, shape index: {}]
  %s5 = inlined_call_operand.vmem [shape: f32[1,10], index: 5, kind: input, shape index: {}]
  %s6 = inlined_call_operand.<no memory space> [shape: f32[1,1], index: 6, kind: input, shape index: {}]
  %s7 = inlined_call_operand.vmem [shape: f32[8,1], index: 7, kind: output, shape index: {}]
  %s8 = sld [smem:[#allocation0]]
  $region38: #{tpu_custom_call.1} parent=0
    _
  %s10 = ssub.s32 1, %s8
  %s11 = scalar_select 0, %s10, %s8
  %v12 = vstv %s6
  %13 = vst [vmem:[#allocation2] sm:$0x1] %v12
  // Predicated region
  $region2: #{tpu_custom_call.1} parent=0 // pred_check
    _
  $region3: #{tpu_custom_call.1} parent=0 // pred_check_branch
    %15 = sbr.rel (0) target = $region5
  $region4: #{tpu_custom_call.1} parent=0 // pred_region
    _
  $region5: #{tpu_custom_call.1} parent=0 // pred_fallthru
    _
  // Predicated region
  $region6: #{tpu_custom_call.1} parent=0 // pred_check
    _
  $region7: #{tpu_custom_call.1} parent=0 // pred_check_branch
    %17 = sbr.rel (0) target = $region9
  $region8: #{tpu_custom_call.1} parent=0 // pred_region
    _
  $region9: #{tpu_custom_call.1} parent=0 // pred_fallthru
    _
  // Predicated region
  $region10: #{tpu_custom_call.1} parent=0 // pred_check
    _
  $region11: #{tpu_custom_call.1} parent=0 // pred_check_branch
    %19 = sbr.rel (0) target = $region13
  $region12: #{tpu_custom_call.1} parent=0 // pred_region
    _
  $region13: #{tpu_custom_call.1} parent=0 // pred_fallthru
    _
  // Predicated region
  $region14: #{tpu_custom_call.1} parent=0 // pred_check
    _
  $region15: #{tpu_custom_call.1} parent=0 // pred_check_branch
    %21 = sbr.rel (0) target = $region17
  $region16: #{tpu_custom_call.1} parent=0 // pred_region
    _
  $region17: #{tpu_custom_call.1} parent=0 // pred_fallthru
    _
  // Predicated region
  $region18: #{tpu_custom_call.1} parent=0 // pred_check
    _
  $region19: #{tpu_custom_call.1} parent=0 // pred_check_branch
    %23 = sbr.rel (0) target = $region21
  $region20: #{tpu_custom_call.1} parent=0 // pred_region
    _
  $region21: #{tpu_custom_call.1} parent=0 // pred_fallthru
    _
  // Predicated region
  $region22: #{tpu_custom_call.1} parent=0 // pred_check
    _
  $region23: #{tpu_custom_call.1} parent=0 // pred_check_branch
    %25 = sbr.rel (0) target = $region25
  $region24: #{tpu_custom_call.1} parent=0 // pred_region
    _
  $region25: #{tpu_custom_call.1} parent=0 // pred_fallthru
    _
  // Predicated region
  $region26: #{tpu_custom_call.1} parent=0 // pred_check
    _
  $region27: #{tpu_custom_call.1} parent=0 // pred_check_branch
    %27 = sbr.rel (0) target = $region29
  $region28: #{tpu_custom_call.1} parent=0 // pred_region
    _
  $region29: #{tpu_custom_call.1} parent=0 // pred_fallthru
    _
  %v28 = vld [vmem:[%s0] sm:$0xff]
  %v29 = vld [vmem:[%s1] sm:$0xff]
  %v30 = vld [vmem:[%s1 + $0x8] sm:$0xff]
  %v31 = vld [vmem:[%s1 + $0x10] sm:$0x3]
  %v32 = vld [vmem:[%s2] sm:$0x1]
  %v34 = vlaneseq
  %v35 = vshrl.u32 %v34, 7
  %v36 = vsub.s32 0, %v35
  %v37 = vrot.slane %v32, %v36
  %vm39 = vcmask 146432
  %v41 = vsel %vm39, %v28, 0
  %vm43 = vcmask 1041408
  %v45 = vsel %vm43, %v31, 0
  %47 = vmatprep.subr.mxu0 0.0
  %48 = vmatpush1.msra.mxu0 %v29
  %49 = vmatprep.subr.mxu0 0.0
  %50 = vmatpush1.msra.mxu0 %v30
  %51 = vmatprep.subr.mxu0 0.0
  %52 = vmatpush1.msra.mxu0 %v45
  %53 = vmatprep.subr.mxu0 0.0
  %54 = vmatpush1.msra.mxu0 0.0
  %55 = vmatprep.subr.mxu0 0.0
  %56 = vmatpush1.msra.mxu0 0.0
  %57 = vmatprep.subr.mxu0 0.0
  %58 = vmatpush1.msra.mxu0 0.0
  %59 = vmatprep.subr.mxu0 0.0
  %60 = vmatpush1.msra.mxu0 0.0
  %61 = vmatprep.subr.mxu0 0.0
  %62 = vmatpush1.msra.mxu0 0.0
  %63 = vmatprep.subr.mxu0 0.0
  %64 = vmatpush1.msra.mxu0 0.0
  %65 = vmatprep.subr.mxu0 0.0
  %66 = vmatpush1.msra.mxu0 0.0
  %67 = vmatprep.subr.mxu0 0.0
  %68 = vmatpush1.msra.mxu0 0.0
  %69 = vmatprep.subr.mxu0 0.0
  %70 = vmatpush1.msra.mxu0 0.0
  %71 = vmatprep.subr.mxu0 0.0
  %72 = vmatpush1.msra.mxu0 0.0
  %73 = vmatprep.subr.mxu0 0.0
  %74 = vmatpush1.msra.mxu0 0.0
  %75 = vmatprep.subr.mxu0 0.0
  %76 = vmatpush1.msra.mxu0 0.0
  %77 = vmatprep.subr.mxu0 0.0
  %78 = vmatpush1.msra.mxu0 0.0
  %79 = vmatprep.subr.mxu0 0.0
  %80 = vmatpush1.msra.mxu0 0.0
  %81 = vmatprep.subr.mxu0 0.0
  %82 = vmatpush1.msra.mxu0 0.0
  %83 = vmatprep.subr.mxu0 0.0
  %84 = vmatpush1.msra.mxu0 0.0
  %85 = vmatprep.subr.mxu0 0.0
  %86 = vmatpush1.msra.mxu0 0.0
  %87 = vmatprep.subr.mxu0 0.0
  %88 = vmatpush1.msra.mxu0 0.0
  %89 = vmatprep.subr.mxu0 0.0
  %90 = vmatpush1.msra.mxu0 0.0
  %91 = vmatprep.subr.mxu0 0.0
  %92 = vmatpush1.msra.mxu0 0.0
  %93 = vmatprep.subr.mxu0 0.0
  %94 = vmatpush1.msra.mxu0 0.0
  %95 = vmatprep.subr.mxu0 0.0
  %96 = vmatpush1.msra.mxu0 0.0
  %97 = vmatprep.subr.mxu0 0.0
  %98 = vmatpush1.msra.mxu0 0.0
  %99 = vmatprep.subr.mxu0 0.0
  %100 = vmatpush1.msra.mxu0 0.0
  %101 = vmatprep.subr.mxu0 0.0
  %102 = vmatpush1.msra.mxu0 0.0
  %103 = vmatprep.subr.mxu0 0.0
  %104 = vmatpush1.msra.mxu0 0.0
  %105 = vmatprep.subr.mxu0 0.0
  %106 = vmatpush1.msra.mxu0 0.0
  %107 = vmatprep.subr.mxu0 0.0
  %108 = vmatpush1.msra.mxu0 0.0
  %109 = vmatprep.subr.mxu0 0.0
  %110 = vmatpush1.msra.mxu0 0.0
  %111 = vmatprep.mubr.f32.mxu0 0.0
  %112 = vmatmul.mubr.f32.gmra.mrb[0].mxu0 %v41
  %v113 = vpop.f32.mrb[0].mxu0
  %v114 = vadd.f32 %v37, %v113
  %v115 = vpop.f32.mrb[0].mxu0
  %116 = vdwg.mxu0
  %vm117 = vcmp.gt.f32.partialorder %v114, 0.0
  %v118 = vmul.f32 %v114, 0.01
  %v119 = vsel %vm117, %v114, %v118
  %v120 = vld [vmem:[%s3] sm:$0xff]
  %v121 = vld [vmem:[%s3 + $0x8] sm:$0xff]
  %v122 = vld [vmem:[%s3 + $0x10] sm:$0xf]
  %v123 = vld [vmem:[%s4] sm:$0x1]
  %v125 = vlaneseq
  %v126 = vshrl.u32 %v125, 7
  %v127 = vsub.s32 0, %v126
  %v128 = vrot.slane %v123, %v127
  %vm130 = vcmask 162816
  %v132 = vsel %vm130, %v119, 0
  %vm134 = vcmask 1043456
  %v136 = vsel %vm134, %v122, 0
  %138 = vmatprep.subr.mxu0 0.0
  %139 = vmatpush1.msra.mxu0 %v120
  %140 = vmatprep.subr.mxu0 0.0
  %141 = vmatpush1.msra.mxu0 %v121
  %142 = vmatprep.subr.mxu0 0.0
  %143 = vmatpush1.msra.mxu0 %v136
  %144 = vmatprep.subr.mxu0 0.0
  %145 = vmatpush1.msra.mxu0 0.0
  %146 = vmatprep.subr.mxu0 0.0
  %147 = vmatpush1.msra.mxu0 0.0
  %148 = vmatprep.subr.mxu0 0.0
  %149 = vmatpush1.msra.mxu0 0.0
  %150 = vmatprep.subr.mxu0 0.0
  %151 = vmatpush1.msra.mxu0 0.0
  %152 = vmatprep.subr.mxu0 0.0
  %153 = vmatpush1.msra.mxu0 0.0
  %154 = vmatprep.subr.mxu0 0.0
  %155 = vmatpush1.msra.mxu0 0.0
  %156 = vmatprep.subr.mxu0 0.0
  %157 = vmatpush1.msra.mxu0 0.0
  %158 = vmatprep.subr.mxu0 0.0
  %159 = vmatpush1.msra.mxu0 0.0
  %160 = vmatprep.subr.mxu0 0.0
  %161 = vmatpush1.msra.mxu0 0.0
  %162 = vmatprep.subr.mxu0 0.0
  %163 = vmatpush1.msra.mxu0 0.0
  %164 = vmatprep.subr.mxu0 0.0
  %165 = vmatpush1.msra.mxu0 0.0
  %166 = vmatprep.subr.mxu0 0.0
  %167 = vmatpush1.msra.mxu0 0.0
  %168 = vmatprep.subr.mxu0 0.0
  %169 = vmatpush1.msra.mxu0 0.0
  %170 = vmatprep.subr.mxu0 0.0
  %171 = vmatpush1.msra.mxu0 0.0
  %172 = vmatprep.subr.mxu0 0.0
  %173 = vmatpush1.msra.mxu0 0.0
  %174 = vmatprep.subr.mxu0 0.0
  %175 = vmatpush1.msra.mxu0 0.0
  %176 = vmatprep.subr.mxu0 0.0
  %177 = vmatpush1.msra.mxu0 0.0
  %178 = vmatprep.subr.mxu0 0.0
  %179 = vmatpush1.msra.mxu0 0.0
  %180 = vmatprep.subr.mxu0 0.0
  %181 = vmatpush1.msra.mxu0 0.0
  %182 = vmatprep.subr.mxu0 0.0
  %183 = vmatpush1.msra.mxu0 0.0
  %184 = vmatprep.subr.mxu0 0.0
  %185 = vmatpush1.msra.mxu0 0.0
  %186 = vmatprep.subr.mxu0 0.0
  %187 = vmatpush1.msra.mxu0 0.0
  %188 = vmatprep.subr.mxu0 0.0
  %189 = vmatpush1.msra.mxu0 0.0
  %190 = vmatprep.subr.mxu0 0.0
  %191 = vmatpush1.msra.mxu0 0.0
  %192 = vmatprep.subr.mxu0 0.0
  %193 = vmatpush1.msra.mxu0 0.0
  %194 = vmatprep.subr.mxu0 0.0
  %195 = vmatpush1.msra.mxu0 0.0
  %196 = vmatprep.subr.mxu0 0.0
  %197 = vmatpush1.msra.mxu0 0.0
  %198 = vmatprep.subr.mxu0 0.0
  %199 = vmatpush1.msra.mxu0 0.0
  %200 = vmatprep.subr.mxu0 0.0
  %201 = vmatpush1.msra.mxu0 0.0
  %202 = vmatprep.mubr.f32.mxu0 0.0
  %203 = vmatmul.mubr.f32.gmra.mrb[0].mxu0 %v132
  %v204 = vpop.f32.mrb[0].mxu0
  %v205 = vadd.f32 %v128, %v204
  %v206 = vpop.f32.mrb[0].mxu0
  %207 = vdwg.mxu0
  %vm208 = vcmp.gt.f32.partialorder %v205, 0.0
  %v209 = vmul.f32 %v205, 0.01
  %v210 = vsel %vm208, %v205, %v209
  %v211 = vld [vmem:[%s5] sm:$0x1]
  %v213 = vlaneseq
  %v214 = vshrl.u32 %v213, 7
  %v215 = vsub.s32 0, %v214
  %v216 = vrot.slane %v211, %v215
  %v218 = vmul.f32 %v210, %v216
  %vm219 = vcmask 80896
  %v220 = vsel %vm219, %v218, 0.0
  %221 = vadd.xlane.f32.xlu0 %v220
  %v222 = vpop.xlane.xlu0 %221
  %v223 = vld [vmem:[#allocation2] sm:$0x1]
  %v225 = vlaneseq
  %v226 = vshrl.u32 %v225, 7
  %v227 = vsub.s32 0, %v226
  %v228 = vrot.slane %v223, %v227
  %v230 = vadd.f32 %v222, %v228
  %vm231 = vcmask 7168
  %232 = vst.msk [vmem:[%s7] sm:$0xff] %vm231, %v230
  // Predicated region
  $region30: #{tpu_custom_call.1} parent=0 // pred_check
    _
  $region31: #{tpu_custom_call.1} parent=0 // pred_check_branch
    %234 = sbr.rel (0) target = $region33
  $region32: #{tpu_custom_call.1} parent=0 // pred_region
    _
  $region33: #{tpu_custom_call.1} parent=0 // pred_fallthru
    _
  // Predicated region
  $region34: #{tpu_custom_call.1} parent=0 // pred_check
    _
  $region35: #{tpu_custom_call.1} parent=0 // pred_check_branch
    %236 = sbr.rel (0) target = $region37
  $region36: #{tpu_custom_call.1} parent=0 // pred_region
    _
  $region37: #{tpu_custom_call.1} parent=0 // pred_fallthru
    _

</llo_original>
